<compile_context>
chip_gen: v7x
topology: tpu7x:2x2x1
jax: 0.10.0
libtpu: 0.0.40
codegen_flags: <defaults>
</compile_context>

<pallas_src>
import jax
import jax.numpy as jnp
from jax.experimental import pallas as pl
from jax.experimental.pallas import tpu as pltpu


def _round_up(x: int, m: int) -> int:
    return ((x + m - 1) // m) * m


def _mlp_kernel(x_ref, w1_ref, b1_ref, w2_ref, b2_ref, o_ref, acc_ref):
    # Grid: (M tiles, K tiles over the flattened input features).
    # x_ref:  (tm, tk)        input tile (already in the matmul dtype)
    # w1_ref: (tk, H_pad)     first-layer weight tile, (in, out) layout
    # b1_ref: (1, H_pad)      f32 bias (resident, Buffered(1))
    # w2_ref: (H_pad, C_pad)  second-layer weight (resident, Buffered(1))
    # b2_ref: (1, C_pad)      f32 bias (resident, Buffered(1))
    # o_ref:  (tm, C_pad)     lane-dense f32 output tile
    # acc_ref:(tm, H_pad)     f32 VMEM accumulator for the hidden activations
    k = pl.program_id(1)

    @pl.when(k == 0)
    def _init():
        # Fold the first-layer bias into the accumulator init: removes a
        # (tm, H_pad) VPU add from the last-K epilogue critical path.
        acc_ref[...] = jnp.broadcast_to(b1_ref[...], acc_ref.shape)

    # x and w1 arrive already in the matmul dtype (prepared once outside the
    # kernel) -> no per-step casts; f32 accumulation on the MXU.
    acc_ref[...] += jnp.dot(x_ref[...], w1_ref[...],
                            preferred_element_type=jnp.float32)

    @pl.when(k == pl.num_programs(1) - 1)
    def _epilogue():
        h = acc_ref[...].astype(w2_ref.dtype)   # no-op on the f32 path
        out = jnp.dot(h, w2_ref[...],
                      preferred_element_type=jnp.float32) + b2_ref[...]
        o_ref[...] = out.astype(o_ref.dtype)


def prepare_params(w1, b1, w2, b2, matmul_dtype=None):
    """One-time weight preparation (NOT per forward call).

    torch convention in:  w1 (H, F), b1 (H,), w2 (C, H), b2 (C,)
    Produces (in, out)-layout weights padded to lane-aligned shapes, stored in
    the matmul dtype (bf16 for the fast MXU path), so the kernel consumes them
    directly with no per-call transpose / pad / cast.  Biases stay f32.
    """
    H, F = w1.shape
    C = w2.shape[0]
    F_pad = _round_up(F, 128)
    H_pad = _round_up(H, 128)
    C_pad = _round_up(C, 128)
    wdt = jnp.dtype(matmul_dtype) if matmul_dtype is not None else jnp.dtype(w1.dtype)

    w1_p = jnp.zeros((F_pad, H_pad), wdt).at[:F, :H].set(w1.T.astype(wdt))
    b1_p = jnp.zeros((1, H_pad), jnp.float32).at[0, :H].set(b1.astype(jnp.float32))
    w2_p = jnp.zeros((H_pad, C_pad), wdt).at[:H, :C].set(w2.T.astype(wdt))
    b2_p = jnp.zeros((1, C_pad), jnp.float32).at[0, :C].set(b2.astype(jnp.float32))
    return {"w1": w1_p, "b1": b1_p, "w2": w2_p, "b2": b2_p,
            "in_features": F, "num_classes": C}


def _vmem_bytes(tm, tk, H_pad, C_pad, mm_itemsize):
    """Estimated VMEM footprint of one pipeline configuration."""
    return (2 * tm * tk * mm_itemsize        # x tiles (double-buffered)
            + 2 * tk * H_pad * mm_itemsize   # w1 tiles (double-buffered, streams over K)
            + 1 * H_pad * 4                  # b1 (Buffered(1))
            + 1 * H_pad * C_pad * mm_itemsize  # w2 (Buffered(1), resident)
            + 1 * C_pad * 4                  # b2 (Buffered(1))
            + 2 * tm * C_pad * 4             # output tiles
            + tm * H_pad * 4)                # f32 accumulator scratch


def _pick_tm(B, tm_max):
    b8 = _round_up(max(B, 1), 8)
    tm = min(tm_max, b8)
    # v7x has 2 TensorCores; keep >= 2 M tiles when the batch permits so the
    # "parallel" M axis can be sharded across cores.
    if b8 >= 16 and b8 // tm < 2:
        tm = _round_up((b8 + 1) // 2, 8)
    return tm


def _pick_tk(F_pad, tm, H_pad, C_pad, mm_itemsize, budget_bytes):
    candidates = sorted({c for c in (F_pad, 2048, 1024, 512, 256, 128)
                         if c <= F_pad and F_pad % c == 0}, reverse=True)
    for tk in candidates:
        if _vmem_bytes(tm, tk, H_pad, C_pad, mm_itemsize) <= budget_bytes:
            return tk
    return 128


def linear_mlp_forward(x, params, *, tm_max=256,
                       vmem_budget_bytes=48 * 1024 * 1024):
    """Forward pass of LinearMLP: Flatten -> Linear -> Linear, fused in one kernel."""
    w1_p, b1_p, w2_p, b2_p = params["w1"], params["b1"], params["w2"], params["b2"]
    F = params["in_features"]
    C = params["num_classes"]
    F_pad, H_pad = w1_p.shape
    C_pad = w2_p.shape[1]

    mm_dtype = w1_p.dtype
    assert w2_p.dtype == mm_dtype, "w1/w2 must share the matmul dtype (prepare_params)"

    B = x.shape[0]
    x_flat = x.reshape(B, -1)                       # nn.Flatten
    assert x_flat.shape[1] == F, "input feature count mismatch"
    # Cast activations to the matmul dtype in the wrapper: bf16 DMA + no
    # in-kernel casts on the bf16 path (no-op on the f32 path).
    x_flat = x_flat.astype(mm_dtype)

    mm_itemsize = jnp.dtype(mm_dtype).itemsize
    tm = _pick_tm(B, tm_max)
    B_pad = _round_up(B, tm)
    tk = _pick_tk(F_pad, tm, H_pad, C_pad, mm_itemsize, vmem_budget_bytes)

    # Pad only when needed (avoid an extra materialized copy of the batch).
    if (B_pad, F_pad) != (B, F):
        x_in = jnp.pad(x_flat, ((0, B_pad - B), (0, F_pad - F)))
    else:
        x_in = x_flat

    grid = (B_pad // tm, F_pad // tk)
    num_m_tiles = grid[0]

    est_vmem = _vmem_bytes(tm, tk, H_pad, C_pad, mm_itemsize)
    vmem_limit = int(min(vmem_budget_bytes,
                         max(est_vmem * 5 // 4, 32 * 1024 * 1024)))

    flops = 2 * B_pad * F_pad * H_pad + 2 * B_pad * H_pad * C_pad
    bytes_accessed = (
        x_in.size * x_in.dtype.itemsize
        + num_m_tiles * w1_p.size * w1_p.dtype.itemsize   # w1 re-streamed per M tile
        + b1_p.size * 4
        + w2_p.size * w2_p.dtype.itemsize
        + b2_p.size * 4
        + B_pad * C_pad * 4
    )

    out_pad = pl.pallas_call(
        _mlp_kernel,
        out_shape=jax.ShapeDtypeStruct((B_pad, C_pad), jnp.float32),
        grid_spec=pltpu.PrefetchScalarGridSpec(
            num_scalar_prefetch=0,
            grid=grid,
            in_specs=[
                pl.BlockSpec((tm, tk), lambda m, k: (m, k)),          # x tile
                pl.BlockSpec((tk, H_pad), lambda m, k: (k, 0)),       # w1 streams over K
                pl.BlockSpec((1, H_pad), lambda m, k: (0, 0),
                             pipeline_mode=pl.Buffered(1)),           # b1 resident
                pl.BlockSpec((H_pad, C_pad), lambda m, k: (0, 0),
                             pipeline_mode=pl.Buffered(1)),           # w2 resident
                pl.BlockSpec((1, C_pad), lambda m, k: (0, 0),
                             pipeline_mode=pl.Buffered(1)),           # b2 resident
            ],
            out_specs=pl.BlockSpec((tm, C_pad), lambda m, k: (m, 0)),
            scratch_shapes=[pltpu.VMEM((tm, H_pad), jnp.float32)],
        ),
        compiler_params=pltpu.CompilerParams(
            dimension_semantics=("parallel", "arbitrary"),
            vmem_limit_bytes=vmem_limit,
        ),
        cost_estimate=pl.CostEstimate(
            flops=flops, transcendentals=0, bytes_accessed=bytes_accessed
        ),
    )(x_in, w1_p, b1_p, w2_p, b2_p)

    # NOTE: for very large hidden sizes, H would also be tiled (second matmul
    # staged over H tiles) to bound the accumulator; not needed here.
    return out_pad[:B, :C]


def init_params(key, input_features, hidden_size, num_classes):
    """Deterministic init mimicking torch.nn.Linear default U[-1/sqrt(fan_in), 1/sqrt(fan_in)]."""
    k1, k2, k3, k4 = jax.random.split(key, 4)
    bound1 = 1.0 / jnp.sqrt(jnp.float32(input_features))
    bound2 = 1.0 / jnp.sqrt(jnp.float32(hidden_size))
    w1 = jax.random.uniform(k1, (hidden_size, input_features), jnp.float32, -bound1, bound1)
    b1 = jax.random.uniform(k2, (hidden_size,), jnp.float32, -bound1, bound1)
    w2 = jax.random.uniform(k3, (num_classes, hidden_size), jnp.float32, -bound2, bound2)
    b2 = jax.random.uniform(k4, (num_classes,), jnp.float32, -bound2, bound2)
    return w1, b1, w2, b2


if __name__ == "__main__":
    # Signal input (B, C, L): batch=2, 4 channels x 64 samples -> 256 flattened
    # features, hidden=32, classes=10.
    B, C_in, L = 2, 4, 64
    input_features = C_in * L
    hidden_size = 32
    num_classes = 10

    key = jax.random.PRNGKey(0)
    kx, kp = jax.random.split(key)
    x = jax.random.normal(kx, (B, C_in, L), jnp.float32)
    w1, b1, w2, b2 = init_params(kp, input_features, hidden_size, num_classes)

    # Pure-JAX reference (torch semantics: Flatten -> Linear -> Linear).
    x_flat = x.reshape(B, -1)
    ref = (x_flat @ w1.T + b1) @ w2.T + b2

    # f32 path (exact module semantics).
    params_f32 = prepare_params(w1, b1, w2, b2)
    logits = jax.block_until_ready(linear_mlp_forward(x, params_f32))
    assert logits.shape == (B, num_classes)
    assert logits.dtype == jnp.float32
    assert jnp.allclose(logits, ref, atol=2e-4, rtol=2e-4)

    # bf16-MXU path (v5e/v6e/v7x friendly): bf16 weights + activations DMA'd in
    # bf16, f32 accumulation.  (The hidden activations are re-quantized to bf16
    # before the second matmul -> slightly looser tolerance.)
    params_bf16 = prepare_params(w1, b1, w2, b2, matmul_dtype=jnp.bfloat16)
    logits_bf16 = jax.block_until_ready(linear_mlp_forward(x, params_bf16))
    assert logits_bf16.shape == (B, num_classes)
    assert jnp.allclose(logits_bf16, ref, atol=5e-2, rtol=5e-2)

    print("KERNEL_OK")
</pallas_src>

<mosaic_0001>
module attributes {stable_mosaic.version = 11 : i64} {
  func.func @_mlp_kernel(%arg0: i32, %arg1: i32, %arg2: memref<8x256xf32, #tpu.memory_space<vmem>>, %arg3: memref<256x128xf32, #tpu.memory_space<vmem>>, %arg4: memref<1x128xf32, #tpu.memory_space<vmem>>, %arg5: memref<128x128xf32, #tpu.memory_space<vmem>>, %arg6: memref<1x128xf32, #tpu.memory_space<vmem>>, %arg7: memref<8x128xf32, #tpu.memory_space<vmem>>, %arg8: memref<8x128xf32, #tpu.memory_space<vmem>>) attributes {dimension_semantics = [#tpu.dimension_semantics<parallel>, #tpu.dimension_semantics<arbitrary>], iteration_bounds = array<i64: 1, 1>, scalar_prefetch = 0 : i64, scratch_operands = 1 : i64, tpu.core_type = #tpu.core_type<tc>, window_params = [{transform_indices = @transform_0, window_bounds = array<i64: 8, 256>}, {transform_indices = @transform_1, window_bounds = array<i64: 256, 128>}, {pipeline_mode = #tpu.pipeline_mode<synchronous>, transform_indices = @transform_2, window_bounds = array<i64: 1, 128>}, {pipeline_mode = #tpu.pipeline_mode<synchronous>, transform_indices = @transform_3, window_bounds = array<i64: 128, 128>}, {pipeline_mode = #tpu.pipeline_mode<synchronous>, transform_indices = @transform_4, window_bounds = array<i64: 1, 128>}, {transform_indices = @transform_5, window_bounds = array<i64: 8, 128>}]} {
    %c0_i32 = arith.constant 0 : i32
    %0 = arith.cmpi eq, %arg1, %c0_i32 : i32
    %1 = arith.extui %0 : i1 to i32
    %c0_i32_0 = arith.constant 0 : i32
    %2 = arith.cmpi ne, %1, %c0_i32_0 : i32
    scf.if %2 {
      %c0_10 = arith.constant 0 : index
      %c0_11 = arith.constant 0 : index
      %12 = vector.load %arg4[%c0_10, %c0_11] : memref<1x128xf32, #tpu.memory_space<vmem>>, vector<1x128xf32>
      %13 = vector.shape_cast %12 : vector<1x128xf32> to vector<1x128xf32>
      %14 = vector.broadcast %13 : vector<1x128xf32> to vector<8x128xf32>
      %c0_12 = arith.constant 0 : index
      %c0_13 = arith.constant 0 : index
      %15 = vector.load %arg8[%c0_12, %c0_13] : memref<8x128xf32, #tpu.memory_space<vmem>>, vector<8x128xf32>
      tpu.vector_store %arg8[%c0_12, %c0_13], %14 {strides = array<i32>} : memref<8x128xf32, #tpu.memory_space<vmem>>, vector<8x128xf32>,
    } else {
    }
    %c0 = arith.constant 0 : index
    %c0_1 = arith.constant 0 : index
    %3 = vector.load %arg8[%c0, %c0_1] : memref<8x128xf32, #tpu.memory_space<vmem>>, vector<8x128xf32>
    %c0_2 = arith.constant 0 : index
    %c0_3 = arith.constant 0 : index
    %4 = vector.load %arg2[%c0_2, %c0_3] : memref<8x256xf32, #tpu.memory_space<vmem>>, vector<8x256xf32>
    %c0_4 = arith.constant 0 : index
    %c0_5 = arith.constant 0 : index
    %5 = vector.load %arg3[%c0_4, %c0_5] : memref<256x128xf32, #tpu.memory_space<vmem>>, vector<256x128xf32>
    %cst = arith.constant dense<0.000000e+00> : vector<8x128xf32>
    %6 = tpu.matmul %4, %5, %cst {dimension_numbers = #tpu.dot_dimension_numbers<[1], [0], [0], [1], [0, 0, 1, 1], [], []>} : vector<8x256xf32>, vector<256x128xf32>, vector<8x128xf32> -> vector<8x128xf32>
    %7 = arith.addf %3, %6 : vector<8x128xf32>
    %c0_6 = arith.constant 0 : index
    %c0_7 = arith.constant 0 : index
    %8 = vector.load %arg8[%c0_6, %c0_7] : memref<8x128xf32, #tpu.memory_space<vmem>>, vector<8x128xf32>
    tpu.vector_store %arg8[%c0_6, %c0_7], %7 {strides = array<i32>} : memref<8x128xf32, #tpu.memory_space<vmem>>, vector<8x128xf32>,
    %c0_i32_8 = arith.constant 0 : i32
    %9 = arith.cmpi eq, %arg1, %c0_i32_8 : i32
    %10 = arith.extui %9 : i1 to i32
    %c0_i32_9 = arith.constant 0 : i32
    %11 = arith.cmpi ne, %10, %c0_i32_9 : i32
    scf.if %11 {
      %c0_10 = arith.constant 0 : index
      %c0_11 = arith.constant 0 : index
      %12 = vector.load %arg8[%c0_10, %c0_11] : memref<8x128xf32, #tpu.memory_space<vmem>>, vector<8x128xf32>
      %c0_12 = arith.constant 0 : index
      %c0_13 = arith.constant 0 : index
      %13 = vector.load %arg5[%c0_12, %c0_13] : memref<128x128xf32, #tpu.memory_space<vmem>>, vector<128x128xf32>
      %cst_14 = arith.constant dense<0.000000e+00> : vector<8x128xf32>
      %14 = tpu.matmul %12, %13, %cst_14 {dimension_numbers = #tpu.dot_dimension_numbers<[1], [0], [0], [1], [0, 0, 1, 1], [], []>} : vector<8x128xf32>, vector<128x128xf32>, vector<8x128xf32> -> vector<8x128xf32>
      %c0_15 = arith.constant 0 : index
      %c0_16 = arith.constant 0 : index
      %15 = vector.load %arg6[%c0_15, %c0_16] : memref<1x128xf32, #tpu.memory_space<vmem>>, vector<1x128xf32>
      %16 = vector.broadcast %15 : vector<1x128xf32> to vector<8x128xf32>
      %17 = arith.addf %14, %16 : vector<8x128xf32>
      %c0_17 = arith.constant 0 : index
      %c0_18 = arith.constant 0 : index
      %18 = vector.load %arg7[%c0_17, %c0_18] : memref<8x128xf32, #tpu.memory_space<vmem>>, vector<8x128xf32>
      tpu.vector_store %arg7[%c0_17, %c0_18], %17 {strides = array<i32>} : memref<8x128xf32, #tpu.memory_space<vmem>>, vector<8x128xf32>,
    } else {
    }
    return
  }
  func.func @transform_0(%arg0: i32, %arg1: i32) -> (i32, i32) {
    %c0_i32 = arith.constant 0 : i32
    return %arg0, %arg1 : i32, i32
  }
  func.func @transform_1(%arg0: i32, %arg1: i32) -> (i32, i32) {
    %c0_i32 = arith.constant 0 : i32
    %c0_i32_0 = arith.constant 0 : i32
    return %arg1, %c0_i32 : i32, i32
  }
  func.func @transform_2(%arg0: i32, %arg1: i32) -> (i32, i32) {
    %c0_i32 = arith.constant 0 : i32
    %c0_i32_0 = arith.constant 0 : i32
    %c0_i32_1 = arith.constant 0 : i32
    return %c0_i32, %c0_i32_0 : i32, i32
  }
  func.func @transform_3(%arg0: i32, %arg1: i32) -> (i32, i32) {
    %c0_i32 = arith.constant 0 : i32
    %c0_i32_0 = arith.constant 0 : i32
    %c0_i32_1 = arith.constant 0 : i32
    return %c0_i32, %c0_i32_0 : i32, i32
  }
  func.func @transform_4(%arg0: i32, %arg1: i32) -> (i32, i32) {
    %c0_i32 = arith.constant 0 : i32
    %c0_i32_0 = arith.constant 0 : i32
    %c0_i32_1 = arith.constant 0 : i32
    return %c0_i32, %c0_i32_0 : i32, i32
  }
  func.func @transform_5(%arg0: i32, %arg1: i32) -> (i32, i32) {
    %c0_i32 = arith.constant 0 : i32
    %c0_i32_0 = arith.constant 0 : i32
    return %arg0, %c0_i32 : i32, i32
  }
}

</mosaic_0001>

<llo_original>
// kernel: tpu_custom_call.1
$region0: #{tpu_custom_call.1}
  #allocation0 [shape = 'u32[]', space=smem, size = 0x4, offset = 0x4, fixed_abs, tag = 'smem constant byte address 0x4 - core index']
  #allocation1 [shape = 'u32[144,128]{1,0:T(1,128)}', space=vmem, size = 0x12000, scoped, tag = 'internal scratch']
  #allocation2 [shape = 'f32[8,128]{1,0:T(8,128)}', space=vmem, size = 0x1000, scoped, tag = 'scratch operand']
  %s0 = inlined_call_operand.hbm [shape: f32[8,256], index: 0, kind: input, shape index: {}]
  %s1 = inlined_call_operand.hbm [shape: f32[256,128], index: 1, kind: input, shape index: {}]
  %s2 = inlined_call_operand.vmem [shape: f32[1,128], index: 2, kind: input, shape index: {}]
  %s3 = inlined_call_operand.hbm [shape: f32[128,128], index: 3, kind: input, shape index: {}]
  %s4 = inlined_call_operand.vmem [shape: f32[1,128], index: 4, kind: input, shape index: {}]
  %s5 = inlined_call_operand.hbm [shape: f32[8,128], index: 5, kind: output, shape index: {}]
  %s6 = sld [smem:[#allocation0]]
  $region50: #{tpu_custom_call.1} parent=0
    _
  %s8 = ssub.s32 1, %s6
  %s9 = scalar_select 0, %s8, %s6
  $region1: #{tpu_custom_call.1} parent=0
    #allocation3 [shape = 'u8[8192]{0}', space=vmem, size = 0x2000, scoped, tag = 'input window, operand 0, single buffered']
    #allocation4 [shape = 's32[1]{0}', space=sflag, size = 0x4, scoped, tag = 'scoped memory for tpu_custom_call.1']
    #allocation5 [shape = 's32[1]{0}', space=sflag, size = 0x4, scoped, tag = 'scoped memory for tpu_custom_call.1']
    #allocation6 [shape = 'u8[131072]{0}', space=vmem, size = 0x20000, scoped, tag = 'input window, operand 1, single buffered']
    #allocation7 [shape = 's32[1]{0}', space=sflag, size = 0x4, scoped, tag = 'scoped memory for tpu_custom_call.1']
    #allocation8 [shape = 'u8[65536]{0}', space=vmem, size = 0x10000, scoped, tag = 'input window, operand 3, single buffered']
    #allocation9 [shape = 'u8[4096]{0}', space=vmem, size = 0x1000, scoped, tag = 'output window, operand 0, single buffered']
    %10 = vsyncpa [#allocation4], 0
    %11 = vsyncpa [#allocation7], 0
    %12 = vsyncpa [#allocation5], 0
    // Predicated region
    $region2: #{tpu_custom_call.1} parent=1 // pred_check
      _
    $region3: #{tpu_custom_call.1} parent=1 // pred_check_branch
      %14 = sbr.rel (0) target = $region5
    $region4: #{tpu_custom_call.1} parent=1 // pred_region
      %s16 = ssub.s32 256, 256
      %17 = vsyncadd [#allocation4], %s16
      %s19 = sshll.u32 [#allocation3], 4
      %s20 = int_to_ptr.vmem [resolvable:$true] %s19
      %22 = dma.hbm_to_vmem [thread:$0]  %s0, 256, %s20, [#allocation4]
    $region5: #{tpu_custom_call.1} parent=1 // pred_fallthru
      _
    // Predicated region
    $region6: #{tpu_custom_call.1} parent=1 // pred_check
      _
    $region7: #{tpu_custom_call.1} parent=1 // pred_check_branch
      %24 = sbr.rel (0) target = $region9
    $region8: #{tpu_custom_call.1} parent=1 // pred_region
      %s26 = ssub.s32 4096, 4096
      %27 = vsyncadd [#allocation7], %s26
      %s28 = sshll.u32 [#allocation6], 4
      %s29 = int_to_ptr.vmem [resolvable:$true] %s28
      %34 = dma.hbm_to_vmem [thread:$0]  %s1, 4096, %s29, [#allocation7], 128, 128, 8
    $region9: #{tpu_custom_call.1} parent=1 // pred_fallthru
      _
    // Predicated region
    $region10: #{tpu_custom_call.1} parent=1 // pred_check
      _
    $region11: #{tpu_custom_call.1} parent=1 // pred_check_branch
      %36 = sbr.rel (0) target = $region13
    $region12: #{tpu_custom_call.1} parent=1 // pred_region
      _
    $region13: #{tpu_custom_call.1} parent=1 // pred_fallthru
      _
    // Predicated region
    $region14: #{tpu_custom_call.1} parent=1 // pred_check
      _
    $region15: #{tpu_custom_call.1} parent=1 // pred_check_branch
      %38 = sbr.rel (0) target = $region17
    $region16: #{tpu_custom_call.1} parent=1 // pred_region
      %s40 = ssub.s32 2048, 2048
      %41 = vsyncadd [#allocation7], %s40
      %s42 = sshll.u32 [#allocation8], 4
      %s43 = int_to_ptr.vmem [resolvable:$true] %s42
      %48 = dma.hbm_to_vmem [thread:$0]  %s3, 2048, %s43, [#allocation7], 128, 128, 8
    $region17: #{tpu_custom_call.1} parent=1 // pred_fallthru
      _
    // Predicated region
    $region18: #{tpu_custom_call.1} parent=1 // pred_check
      _
    $region19: #{tpu_custom_call.1} parent=1 // pred_check_branch
      %50 = sbr.rel (0) target = $region21
    $region20: #{tpu_custom_call.1} parent=1 // pred_region
      _
    $region21: #{tpu_custom_call.1} parent=1 // pred_fallthru
      _
    // Predicated region
    $region22: #{tpu_custom_call.1} parent=1 // pred_check
      _
    $region23: #{tpu_custom_call.1} parent=1 // pred_check_branch
      %52 = sbr.rel (0) target = $region25
    $region24: #{tpu_custom_call.1} parent=1 // pred_region
      %53 = dma.done [#allocation4], 256
    $region25: #{tpu_custom_call.1} parent=1 // pred_fallthru
      _
    // Predicated region
    $region26: #{tpu_custom_call.1} parent=1 // pred_check
      _
    $region27: #{tpu_custom_call.1} parent=1 // pred_check_branch
      %55 = sbr.rel (0) target = $region29
    $region28: #{tpu_custom_call.1} parent=1 // pred_region
      %56 = dma.done [#allocation7], 4096
    $region29: #{tpu_custom_call.1} parent=1 // pred_fallthru
      _
    // Predicated region
    $region30: #{tpu_custom_call.1} parent=1 // pred_check
      _
    $region31: #{tpu_custom_call.1} parent=1 // pred_check_branch
      %58 = sbr.rel (0) target = $region33
    $region32: #{tpu_custom_call.1} parent=1 // pred_region
      %59 = dma.done [#allocation7], 2048
    $region33: #{tpu_custom_call.1} parent=1 // pred_fallthru
      _
    %p60 = scmp.eq.s32.totalorder 0, 0
    // Predicated region
    $region34: #{tpu_custom_call.1} parent=1 // pred_check
      %p61 = pneg %p60
    $region35: #{tpu_custom_call.1} parent=1 // pred_check_branch
      %63 = sbr.rel (%p61) target = $region37
    $region36: #{tpu_custom_call.1} parent=1 // pred_region
      %v64 = vld [vmem:[%s2] sm:$0x1]
      %v66 = vlaneseq
      %v67 = vshrl.u32 %v66, 7
      %v68 = vsub.s32 0, %v67
      %v69 = vrot.slane %v64, %v68
      %71 = vst [vmem:[#allocation2] sm:$0xff] %v69
    $region37: #{tpu_custom_call.1} parent=1 // pred_fallthru
      _
    %v72 = vld [vmem:[#allocation2] sm:$0xff]
    %v73 = vld [vmem:[#allocation3] sm:$0xff]
    %v74 = vld [vmem:[#allocation3 + $0x8] sm:$0xff]
    %v75 = vld [vmem:[#allocation6] sm:$0xff]
    %v76 = vld [vmem:[#allocation6 + $0x8] sm:$0xff]
    %v77 = vld [vmem:[#allocation6 + $0x10] sm:$0xff]
    %v78 = vld [vmem:[#allocation6 + $0x18] sm:$0xff]
    %v79 = vld [vmem:[#allocation6 + $0x20] sm:$0xff]
    %v80 = vld [vmem:[#allocation6 + $0x28] sm:$0xff]
    %v81 = vld [vmem:[#allocation6 + $0x30] sm:$0xff]
    %v82 = vld [vmem:[#allocation6 + $0x38] sm:$0xff]
    %v83 = vld [vmem:[#allocation6 + $0x40] sm:$0xff]
    %v84 = vld [vmem:[#allocation6 + $0x48] sm:$0xff]
    %v85 = vld [vmem:[#allocation6 + $0x50] sm:$0xff]
    %v86 = vld [vmem:[#allocation6 + $0x58] sm:$0xff]
    %v87 = vld [vmem:[#allocation6 + $0x60] sm:$0xff]
    %v88 = vld [vmem:[#allocation6 + $0x68] sm:$0xff]
    %v89 = vld [vmem:[#allocation6 + $0x70] sm:$0xff]
    %v90 = vld [vmem:[#allocation6 + $0x78] sm:$0xff]
    %v91 = vld [vmem:[#allocation6 + $0x80] sm:$0xff]
    %v92 = vld [vmem:[#allocation6 + $0x88] sm:$0xff]
    %v93 = vld [vmem:[#allocation6 + $0x90] sm:$0xff]
    %v94 = vld [vmem:[#allocation6 + $0x98] sm:$0xff]
    %v95 = vld [vmem:[#allocation6 + $0xa0] sm:$0xff]
    %v96 = vld [vmem:[#allocation6 + $0xa8] sm:$0xff]
    %v97 = vld [vmem:[#allocation6 + $0xb0] sm:$0xff]
    %v98 = vld [vmem:[#allocation6 + $0xb8] sm:$0xff]
    %v99 = vld [vmem:[#allocation6 + $0xc0] sm:$0xff]
    %v100 = vld [vmem:[#allocation6 + $0xc8] sm:$0xff]
    %v101 = vld [vmem:[#allocation6 + $0xd0] sm:$0xff]
    %v102 = vld [vmem:[#allocation6 + $0xd8] sm:$0xff]
    %v103 = vld [vmem:[#allocation6 + $0xe0] sm:$0xff]
    %v104 = vld [vmem:[#allocation6 + $0xe8] sm:$0xff]
    %v105 = vld [vmem:[#allocation6 + $0xf0] sm:$0xff]
    %v106 = vld [vmem:[#allocation6 + $0xf8] sm:$0xff]
    %107 = vmatprep.subr.mxu0 0.0
    %108 = vmatpush1.msra.mxu0 %v75
    %109 = vmatprep.subr.mxu0 0.0
    %110 = vmatpush1.msra.mxu0 %v76
    %111 = vmatprep.subr.mxu0 0.0
    %112 = vmatpush1.msra.mxu0 %v77
    %113 = vmatprep.subr.mxu0 0.0
    %114 = vmatpush1.msra.mxu0 %v78
    %115 = vmatprep.subr.mxu0 0.0
    %116 = vmatpush1.msra.mxu0 %v79
    %117 = vmatprep.subr.mxu0 0.0
    %118 = vmatpush1.msra.mxu0 %v80
    %119 = vmatprep.subr.mxu0 0.0
    %120 = vmatpush1.msra.mxu0 %v81
    %121 = vmatprep.subr.mxu0 0.0
    %122 = vmatpush1.msra.mxu0 %v82
    %123 = vmatprep.subr.mxu0 0.0
    %124 = vmatpush1.msra.mxu0 %v83
    %125 = vmatprep.subr.mxu0 0.0
    %126 = vmatpush1.msra.mxu0 %v84
    %127 = vmatprep.subr.mxu0 0.0
    %128 = vmatpush1.msra.mxu0 %v85
    %129 = vmatprep.subr.mxu0 0.0
    %130 = vmatpush1.msra.mxu0 %v86
    %131 = vmatprep.subr.mxu0 0.0
    %132 = vmatpush1.msra.mxu0 %v87
    %133 = vmatprep.subr.mxu0 0.0
    %134 = vmatpush1.msra.mxu0 %v88
    %135 = vmatprep.subr.mxu0 0.0
    %136 = vmatpush1.msra.mxu0 %v89
    %137 = vmatprep.subr.mxu0 0.0
    %138 = vmatpush1.msra.mxu0 %v90
    %139 = vmatprep.subr.mxu0 0.0
    %140 = vmatpush1.msra.mxu0 %v91
    %141 = vmatprep.subr.mxu0 0.0
    %142 = vmatpush1.msra.mxu0 %v92
    %143 = vmatprep.subr.mxu0 0.0
    %144 = vmatpush1.msra.mxu0 %v93
    %145 = vmatprep.subr.mxu0 0.0
    %146 = vmatpush1.msra.mxu0 %v94
    %147 = vmatprep.subr.mxu0 0.0
    %148 = vmatpush1.msra.mxu0 %v95
    %149 = vmatprep.subr.mxu0 0.0
    %150 = vmatpush1.msra.mxu0 %v96
    %151 = vmatprep.subr.mxu0 0.0
    %152 = vmatpush1.msra.mxu0 %v97
    %153 = vmatprep.subr.mxu0 0.0
    %154 = vmatpush1.msra.mxu0 %v98
    %155 = vmatprep.subr.mxu0 0.0
    %156 = vmatpush1.msra.mxu0 %v99
    %157 = vmatprep.subr.mxu0 0.0
    %158 = vmatpush1.msra.mxu0 %v100
    %159 = vmatprep.subr.mxu0 0.0
    %160 = vmatpush1.msra.mxu0 %v101
    %161 = vmatprep.subr.mxu0 0.0
    %162 = vmatpush1.msra.mxu0 %v102
    %163 = vmatprep.subr.mxu0 0.0
    %164 = vmatpush1.msra.mxu0 %v103
    %165 = vmatprep.subr.mxu0 0.0
    %166 = vmatpush1.msra.mxu0 %v104
    %167 = vmatprep.subr.mxu0 0.0
    %168 = vmatpush1.msra.mxu0 %v105
    %169 = vmatprep.subr.mxu0 0.0
    %170 = vmatpush1.msra.mxu0 %v106
    %171 = vmatprep.mubr.f32.mxu0 %v74
    %172 = vmatmul.mubr.f32.gmra.mrb[0].mxu0 %v73
    %v173 = vpop.f32.mrb[0].mxu0
    %v174 = vadd.f32 0.0, %v173
    %v175 = vpop.f32.mrb[0].mxu0
    %176 = vdwg.mxu0
    %v177 = vadd.f32 %v72, %v174
    %178 = vst [vmem:[#allocation2] sm:$0xff] %v177
    // Predicated region
    $region38: #{tpu_custom_call.1} parent=1 // pred_check
      %p179 = pneg %p60
    $region39: #{tpu_custom_call.1} parent=1 // pred_check_branch
      %181 = sbr.rel (%p179) target = $region41
    $region40: #{tpu_custom_call.1} parent=1 // pred_region
      %v182 = vld [vmem:[#allocation2] sm:$0xff]
      %v183 = vld [vmem:[#allocation8] sm:$0xff]
      %v184 = vld [vmem:[#allocation8 + $0x8] sm:$0xff]
      %v185 = vld [vmem:[#allocation8 + $0x10] sm:$0xff]
      %v186 = vld [vmem:[#allocation8 + $0x18] sm:$0xff]
      %v187 = vld [vmem:[#allocation8 + $0x20] sm:$0xff]
      %v188 = vld [vmem:[#allocation8 + $0x28] sm:$0xff]
      %v189 = vld [vmem:[#allocation8 + $0x30] sm:$0xff]
      %v190 = vld [vmem:[#allocation8 + $0x38] sm:$0xff]
      %v191 = vld [vmem:[#allocation8 + $0x40] sm:$0xff]
      %v192 = vld [vmem:[#allocation8 + $0x48] sm:$0xff]
      %v193 = vld [vmem:[#allocation8 + $0x50] sm:$0xff]
      %v194 = vld [vmem:[#allocation8 + $0x58] sm:$0xff]
      %v195 = vld [vmem:[#allocation8 + $0x60] sm:$0xff]
      %v196 = vld [vmem:[#allocation8 + $0x68] sm:$0xff]
      %v197 = vld [vmem:[#allocation8 + $0x70] sm:$0xff]
      %v198 = vld [vmem:[#allocation8 + $0x78] sm:$0xff]
      %v199 = vld [vmem:[%s4] sm:$0x1]
      %v201 = vlaneseq
      %v202 = vshrl.u32 %v201, 7
      %v203 = vsub.s32 0, %v202
      %v204 = vrot.slane %v199, %v203
      %206 = vmatprep.subr.mxu0 0.0
      %207 = vmatpush1.msra.mxu0 %v183
      %208 = vmatprep.subr.mxu0 0.0
      %209 = vmatpush1.msra.mxu0 %v184
      %210 = vmatprep.subr.mxu0 0.0
      %211 = vmatpush1.msra.mxu0 %v185
      %212 = vmatprep.subr.mxu0 0.0
      %213 = vmatpush1.msra.mxu0 %v186
      %214 = vmatprep.subr.mxu0 0.0
      %215 = vmatpush1.msra.mxu0 %v187
      %216 = vmatprep.subr.mxu0 0.0
      %217 = vmatpush1.msra.mxu0 %v188
      %218 = vmatprep.subr.mxu0 0.0
      %219 = vmatpush1.msra.mxu0 %v189
      %220 = vmatprep.subr.mxu0 0.0
      %221 = vmatpush1.msra.mxu0 %v190
      %222 = vmatprep.subr.mxu0 0.0
      %223 = vmatpush1.msra.mxu0 %v191
      %224 = vmatprep.subr.mxu0 0.0
      %225 = vmatpush1.msra.mxu0 %v192
      %226 = vmatprep.subr.mxu0 0.0
      %227 = vmatpush1.msra.mxu0 %v193
      %228 = vmatprep.subr.mxu0 0.0
      %229 = vmatpush1.msra.mxu0 %v194
      %230 = vmatprep.subr.mxu0 0.0
      %231 = vmatpush1.msra.mxu0 %v195
      %232 = vmatprep.subr.mxu0 0.0
      %233 = vmatpush1.msra.mxu0 %v196
      %234 = vmatprep.subr.mxu0 0.0
      %235 = vmatpush1.msra.mxu0 %v197
      %236 = vmatprep.subr.mxu0 0.0
      %237 = vmatpush1.msra.mxu0 %v198
      %238 = vmatprep.subr.mxu0 0.0
      %239 = vmatpush1.msra.mxu0 0.0
      %240 = vmatprep.subr.mxu0 0.0
      %241 = vmatpush1.msra.mxu0 0.0
      %242 = vmatprep.subr.mxu0 0.0
      %243 = vmatpush1.msra.mxu0 0.0
      %244 = vmatprep.subr.mxu0 0.0
      %245 = vmatpush1.msra.mxu0 0.0
      %246 = vmatprep.subr.mxu0 0.0
      %247 = vmatpush1.msra.mxu0 0.0
      %248 = vmatprep.subr.mxu0 0.0
      %249 = vmatpush1.msra.mxu0 0.0
      %250 = vmatprep.subr.mxu0 0.0
      %251 = vmatpush1.msra.mxu0 0.0
      %252 = vmatprep.subr.mxu0 0.0
      %253 = vmatpush1.msra.mxu0 0.0
      %254 = vmatprep.subr.mxu0 0.0
      %255 = vmatpush1.msra.mxu0 0.0
      %256 = vmatprep.subr.mxu0 0.0
      %257 = vmatpush1.msra.mxu0 0.0
      %258 = vmatprep.subr.mxu0 0.0
      %259 = vmatpush1.msra.mxu0 0.0
      %260 = vmatprep.subr.mxu0 0.0
      %261 = vmatpush1.msra.mxu0 0.0
      %262 = vmatprep.subr.mxu0 0.0
      %263 = vmatpush1.msra.mxu0 0.0
      %264 = vmatprep.subr.mxu0 0.0
      %265 = vmatpush1.msra.mxu0 0.0
      %266 = vmatprep.subr.mxu0 0.0
      %267 = vmatpush1.msra.mxu0 0.0
      %268 = vmatprep.subr.mxu0 0.0
      %269 = vmatpush1.msra.mxu0 0.0
      %270 = vmatprep.mubr.f32.mxu0 0.0
      %271 = vmatmul.mubr.f32.gmra.mrb[0].mxu0 %v182
      %v272 = vpop.f32.mrb[0].mxu0
      %v273 = vadd.f32 %v204, %v272
      %v274 = vpop.f32.mrb[0].mxu0
      %275 = vdwg.mxu0
      %276 = vst [vmem:[#allocation9] sm:$0xff] %v273
    $region41: #{tpu_custom_call.1} parent=1 // pred_fallthru
      _
    // Predicated region
    $region42: #{tpu_custom_call.1} parent=1 // pred_check
      _
    $region43: #{tpu_custom_call.1} parent=1 // pred_check_branch
      %278 = sbr.rel (0) target = $region45
    $region44: #{tpu_custom_call.1} parent=1 // pred_region
      %s280 = ssub.s32 128, 128
      %281 = vsyncadd [#allocation5], %s280
      %s283 = sshll.u32 [#allocation9], 4
      %s284 = int_to_ptr.vmem [resolvable:$true] %s283
      %286 = dma.vmem_to_hbm [thread:$0]  %s284, 128, %s5, [#allocation5]
    $region45: #{tpu_custom_call.1} parent=1 // pred_fallthru
      _
    // Predicated region
    $region46: #{tpu_custom_call.1} parent=1 // pred_check
      _
    $region47: #{tpu_custom_call.1} parent=1 // pred_check_branch
      %288 = sbr.rel (0) target = $region49
    $region48: #{tpu_custom_call.1} parent=1 // pred_region
      %289 = dma.done [#allocation5], 128
    $region49: #{tpu_custom_call.1} parent=1 // pred_fallthru
      _
    %290 = vsyncpa [#allocation4], 1
    %291 = vsyncpa [#allocation7], 1
    %292 = vsyncpa [#allocation5], 1

</llo_original>
